<compile_context>
chip_gen: v6e
topology: v6e:2x2x1
jax: 0.10.0
libtpu: 0.0.40
codegen_flags: <defaults>
</compile_context>

<pallas_src>
import jax
import jax.numpy as jnp
from jax import lax
from jax.experimental import pallas as pl
from jax.experimental.pallas import tpu as pltpu


def _round_up(x, m):
    return ((x + m - 1) // m) * m


def _pick_tile(dim, target, align):
    """Pick (tile, padded_dim): tile is either the full dim (small case, always
    legal as a BlockSpec full-extent block) or an `align`-multiple divisor of the
    (possibly padded) dim."""
    if dim <= target:
        return dim, dim
    t = (target // align) * align
    while t >= align:
        if dim % t == 0:
            return t, dim
        t -= align
    t = (target // align) * align
    return t, _round_up(dim, t)


def _matmul_wt_kernel(x_ref, w_ref, o_ref, acc_ref):
    # o = x @ w.T with w stored (out_features, in_features): contract K with K
    # directly on the MXU (no in-kernel transpose), accumulate in f32.
    @pl.when(pl.program_id(2) == 0)
    def _zero():
        acc_ref[...] = jnp.zeros_like(acc_ref)

    acc_ref[...] += lax.dot_general(
        x_ref[...],
        w_ref[...],
        dimension_numbers=(((1,), (1,)), ((), ())),
        preferred_element_type=jnp.float32,
    )

    @pl.when(pl.program_id(2) == pl.num_programs(2) - 1)
    def _store():
        o_ref[...] = acc_ref[...].astype(o_ref.dtype)


def matmul_wt(x2d, w, *, tm_target=256, tn_target=512, tk_target=512):
    """y[M, N] = x2d[M, K] @ w[N, K].T computed by a tiled Pallas TPU kernel.

    - grid = (M/tm, N/tn, K/tk), K last ("arbitrary" reduction axis), M/N
      "parallel" so v7x can shard across its 2 TensorCores.
    - f32 VMEM accumulator, zero-init at k==0, write-out at the last k step.
    - small dims fall back to full-extent blocks (legal regardless of (8,128)).
    - tiny-M (decode) weight stream uses a deeper pipeline (pl.Buffered(3)).
    """
    M, K = x2d.shape
    N, K2 = w.shape
    assert K == K2, (K, K2)

    tm, Mp = _pick_tile(M, tm_target, 8)
    tn, Np = _pick_tile(N, tn_target, 128)
    tk, Kp = _pick_tile(K, tk_target, 128)

    if (Mp, Kp) != (M, K):
        x2d = jnp.pad(x2d, ((0, Mp - M), (0, Kp - K)))
    if (Np, Kp) != (N, K):
        w = jnp.pad(w, ((0, Np - N), (0, Kp - K)))

    grid = (Mp // tm, Np // tn, Kp // tk)

    # Decode regime (M tiny): the kernel is pure weight-streaming; deepen the
    # weight double-buffer so the DMA engine stays saturated.
    if M <= 64 and grid[1] * grid[2] >= 3:
        w_spec = pl.BlockSpec((tn, tk), lambda i, j, k: (j, k),
                              pipeline_mode=pl.Buffered(3))
    else:
        w_spec = pl.BlockSpec((tn, tk), lambda i, j, k: (j, k))

    itemsize = jnp.dtype(x2d.dtype).itemsize
    out_itemsize = itemsize
    cost = pl.CostEstimate(
        flops=2 * Mp * Np * Kp,
        transcendentals=0,
        bytes_accessed=(Mp * Kp + Np * Kp) * itemsize + Mp * Np * out_itemsize,
    )

    y = pl.pallas_call(
        _matmul_wt_kernel,
        out_shape=jax.ShapeDtypeStruct((Mp, Np), x2d.dtype),
        grid_spec=pltpu.PrefetchScalarGridSpec(
            num_scalar_prefetch=0,
            grid=grid,
            in_specs=[
                pl.BlockSpec((tm, tk), lambda i, j, k: (i, k)),
                w_spec,
            ],
            out_specs=pl.BlockSpec((tm, tn), lambda i, j, k: (i, j)),
            scratch_shapes=[pltpu.VMEM((tm, tn), jnp.float32)],
        ),
        compiler_params=pltpu.CompilerParams(
            dimension_semantics=("parallel", "parallel", "arbitrary"),
            vmem_limit_bytes=32 * 1024 * 1024,
        ),
        cost_estimate=cost,
    )(x2d, w)

    if (Mp, Np) != (M, N):
        y = y[:M, :N]
    return y


class UpLayerPallas:
    """JAX/Pallas re-implementation of convert_llama_model.UpLayer.

    forward semantics:
      - prefill (seq > 1): y = x @ weight.T                      -> (B, S, out_features)
      - decode  (seq == 1): gather sparse rows of weight once,
                            y = x @ weight[indices, :].T         -> (B, 1, neuron_num)
    """

    def __init__(self, weight, num, sparsity, memory_limit, compute_dtype=jnp.float32):
        # Store the weight ONCE in the compute dtype (bf16 recommended for real
        # Llama shapes) so no full-weight HBM astype pass happens per forward.
        self.weight = jnp.asarray(weight).astype(compute_dtype)
        self.neuron_num = int(self.weight.shape[0] * sparsity)
        self.num = num
        self.memory_limit = memory_limit
        self.weight_updated = False
        # Lane-pad decode N up to a 128 multiple so the kernel's output stores
        # are unmasked (lane-dense); extra rows are zeros and sliced off.
        self._padded_neuron_num = _round_up(max(self.neuron_num, 1), 128)
        # Placeholder mirrors torch's filtered_W buffer, but in the compute
        # dtype (fp16 is a poor TPU dtype) and already lane-padded.
        self.filtered_W = jnp.zeros(
            (self._padded_neuron_num, self.weight.shape[1]), compute_dtype
        )
        # TODO(synk): torch moves weight/filtered_W between CPU and GPU when
        # memory_limit is set; host/device placement has no in-kernel Pallas
        # equivalent and is omitted here.

    def __call__(self, x, indices_list_all):
        # NOTE: the python-side cache state (weight_updated / filtered_W) mirrors
        # the torch module and is not jax.jit-safe; keep this dispatch outside
        # any jitted region.
        B, S, D = x.shape
        if S > 1:
            self.weight_updated = False
            w = self.weight
            n_out = self.weight.shape[0]
        else:
            if not self.weight_updated:
                # In the torch code `indices_list_all` is a global; here it is
                # passed in.  Gather happens once per cache refresh, already in
                # the compute dtype (no per-call cast of the weight).
                indices = jnp.asarray(indices_list_all[self.num - 6])
                filtered = self.weight[indices, :]
                pad = self._padded_neuron_num - self.neuron_num
                if pad:
                    filtered = jnp.pad(filtered, ((0, pad), (0, 0)))
                self.filtered_W = filtered
                self.weight_updated = True
            w = self.filtered_W
            n_out = self.neuron_num

        x2d = x.reshape(B * S, D)
        if x2d.dtype != w.dtype:
            # cast the (small) activations, never the weight, per call
            x2d = x2d.astype(w.dtype)
        y2d = matmul_wt(x2d, w)
        if y2d.shape[1] != n_out:
            y2d = y2d[:, :n_out]
        return y2d.reshape(B, S, n_out)


if __name__ == "__main__":
    key = jax.random.PRNGKey(0)
    k_w, k_xp, k_xd, k_idx = jax.random.split(key, 4)

    in_features = 32
    out_features = 64
    sparsity = 0.5
    batch = 2
    seq = 8

    # deterministic synthetic parameters
    weight = jax.random.normal(k_w, (out_features, in_features), jnp.float32)

    # synthetic replacement for the global `indices_list_all` (num=6 -> entry 0)
    neuron_num = int(out_features * sparsity)
    indices = jax.random.permutation(k_idx, out_features)[:neuron_num]
    indices_list_all = [indices]

    layer = UpLayerPallas(weight, num=6, sparsity=sparsity, memory_limit=False,
                          compute_dtype=jnp.float32)

    # --- prefill path (seq > 1): dense x @ W.T ---
    x_prefill = jax.random.normal(k_xp, (batch, seq, in_features), jnp.float32)
    y_prefill = jax.block_until_ready(layer(x_prefill, indices_list_all))
    ref_prefill = x_prefill @ weight.T
    assert y_prefill.shape == (batch, seq, out_features)
    assert jnp.allclose(y_prefill, ref_prefill, atol=1e-4, rtol=1e-4)

    # --- decode path (seq == 1): sparse-filtered x @ W[indices].T ---
    x_decode = jax.random.normal(k_xd, (batch, 1, in_features), jnp.float32)
    y_decode = jax.block_until_ready(layer(x_decode, indices_list_all))
    ref_decode = x_decode @ weight[indices, :].T
    assert y_decode.shape == (batch, 1, neuron_num)
    assert jnp.allclose(y_decode, ref_decode, atol=1e-4, rtol=1e-4)

    print("KERNEL_OK")
</pallas_src>

<mosaic_0001>
module attributes {stable_mosaic.version = 11 : i64} {
  func.func @_matmul_wt_kernel(%arg0: i32, %arg1: i32, %arg2: i32, %arg3: memref<16x32xf32, #tpu.memory_space<vmem>>, %arg4: memref<64x32xf32, #tpu.memory_space<vmem>>, %arg5: memref<16x64xf32, #tpu.memory_space<vmem>>, %arg6: memref<16x64xf32, #tpu.memory_space<vmem>>) attributes {dimension_semantics = [#tpu.dimension_semantics<parallel>, #tpu.dimension_semantics<parallel>, #tpu.dimension_semantics<arbitrary>], iteration_bounds = array<i64: 1, 1, 1>, scalar_prefetch = 0 : i64, scratch_operands = 1 : i64, tpu.core_type = #tpu.core_type<tc>, window_params = [{transform_indices = @transform_0, window_bounds = array<i64: 16, 32>}, {transform_indices = @transform_1, window_bounds = array<i64: 64, 32>}, {transform_indices = @transform_2, window_bounds = array<i64: 16, 64>}]} {
    %c0_i32 = arith.constant 0 : i32
    %0 = arith.cmpi eq, %arg2, %c0_i32 : i32
    %1 = arith.extui %0 : i1 to i32
    %c0_i32_0 = arith.constant 0 : i32
    %2 = arith.cmpi ne, %1, %c0_i32_0 : i32
    scf.if %2 {
      %cst_10 = arith.constant 0.000000e+00 : f32
      %12 = vector.broadcast %cst_10 : f32 to vector<16x64xf32>
      %c0_11 = arith.constant 0 : index
      %c0_12 = arith.constant 0 : index
      %13 = vector.load %arg6[%c0_11, %c0_12] : memref<16x64xf32, #tpu.memory_space<vmem>>, vector<16x64xf32>
      tpu.vector_store %arg6[%c0_11, %c0_12], %12 {strides = array<i32>} : memref<16x64xf32, #tpu.memory_space<vmem>>, vector<16x64xf32>,
    } else {
    }
    %c0 = arith.constant 0 : index
    %c0_1 = arith.constant 0 : index
    %3 = vector.load %arg6[%c0, %c0_1] : memref<16x64xf32, #tpu.memory_space<vmem>>, vector<16x64xf32>
    %c0_2 = arith.constant 0 : index
    %c0_3 = arith.constant 0 : index
    %4 = vector.load %arg3[%c0_2, %c0_3] : memref<16x32xf32, #tpu.memory_space<vmem>>, vector<16x32xf32>
    %c0_4 = arith.constant 0 : index
    %c0_5 = arith.constant 0 : index
    %5 = vector.load %arg4[%c0_4, %c0_5] : memref<64x32xf32, #tpu.memory_space<vmem>>, vector<64x32xf32>
    %cst = arith.constant dense<0.000000e+00> : vector<16x64xf32>
    %6 = tpu.matmul %4, %5, %cst {dimension_numbers = #tpu.dot_dimension_numbers<[1], [1], [0], [0], [0, 0, 1, 0], [], []>} : vector<16x32xf32>, vector<64x32xf32>, vector<16x64xf32> -> vector<16x64xf32>
    %7 = arith.addf %3, %6 : vector<16x64xf32>
    %c0_6 = arith.constant 0 : index
    %c0_7 = arith.constant 0 : index
    %8 = vector.load %arg6[%c0_6, %c0_7] : memref<16x64xf32, #tpu.memory_space<vmem>>, vector<16x64xf32>
    tpu.vector_store %arg6[%c0_6, %c0_7], %7 {strides = array<i32>} : memref<16x64xf32, #tpu.memory_space<vmem>>, vector<16x64xf32>,
    %c0_i32_8 = arith.constant 0 : i32
    %9 = arith.cmpi eq, %arg2, %c0_i32_8 : i32
    %10 = arith.extui %9 : i1 to i32
    %c0_i32_9 = arith.constant 0 : i32
    %11 = arith.cmpi ne, %10, %c0_i32_9 : i32
    scf.if %11 {
      %c0_10 = arith.constant 0 : index
      %c0_11 = arith.constant 0 : index
      %12 = vector.load %arg6[%c0_10, %c0_11] : memref<16x64xf32, #tpu.memory_space<vmem>>, vector<16x64xf32>
      %c0_12 = arith.constant 0 : index
      %c0_13 = arith.constant 0 : index
      %13 = vector.load %arg5[%c0_12, %c0_13] : memref<16x64xf32, #tpu.memory_space<vmem>>, vector<16x64xf32>
      tpu.vector_store %arg5[%c0_12, %c0_13], %12 {strides = array<i32>} : memref<16x64xf32, #tpu.memory_space<vmem>>, vector<16x64xf32>,
    } else {
    }
    return
  }
  func.func @transform_0(%arg0: i32, %arg1: i32, %arg2: i32) -> (i32, i32) {
    %c0_i32 = arith.constant 0 : i32
    return %arg0, %arg2 : i32, i32
  }
  func.func @transform_1(%arg0: i32, %arg1: i32, %arg2: i32) -> (i32, i32) {
    %c0_i32 = arith.constant 0 : i32
    return %arg1, %arg2 : i32, i32
  }
  func.func @transform_2(%arg0: i32, %arg1: i32, %arg2: i32) -> (i32, i32) {
    %c0_i32 = arith.constant 0 : i32
    return %arg0, %arg1 : i32, i32
  }
}

</mosaic_0001>

<llo_original>
// kernel: tpu_custom_call.1
$region0: #{tpu_custom_call.1}
  #allocation0 [shape = 'u32[]', space=smem, size = 0x4, offset = 0x4, fixed_abs, tag = 'smem constant byte address 0x4 - core index']
  #allocation1 [shape = 'u32[144,128]{1,0:T(1,128)}', space=vmem, size = 0x12000, scoped, tag = 'internal scratch']
  #allocation2 [shape = 'f32[16,64]{1,0:T(8,128)}', space=vmem, size = 0x2000, scoped, tag = 'scratch operand']
  %s0 = inlined_call_operand.vmem [shape: f32[16,32], index: 0, kind: input, shape index: {}]
  %s1 = inlined_call_operand.vmem [shape: f32[64,32], index: 1, kind: input, shape index: {}]
  %s2 = inlined_call_operand.hbm [shape: f32[16,64], index: 2, kind: output, shape index: {}]
  %s3 = sld [smem:[#allocation0]]
  $region26: #{tpu_custom_call.1} parent=0
    _
  %s5 = ssub.s32 1, %s3
  %s6 = scalar_select 0, %s5, %s3
  $region1: #{tpu_custom_call.1} parent=0
    #allocation3 [shape = 'u8[8192]{0}', space=vmem, size = 0x2000, scoped, tag = 'output window, operand 0, single buffered']
    #allocation4 [shape = 's32[1]{0}', space=sflag, size = 0x4, scoped, tag = 'scoped memory for tpu_custom_call.1']
    %7 = vsyncpa [#allocation4], 0
    // Predicated region
    $region2: #{tpu_custom_call.1} parent=1 // pred_check
      _
    $region3: #{tpu_custom_call.1} parent=1 // pred_check_branch
      %9 = sbr.rel (0) target = $region5
    $region4: #{tpu_custom_call.1} parent=1 // pred_region
      _
    $region5: #{tpu_custom_call.1} parent=1 // pred_fallthru
      _
    // Predicated region
    $region6: #{tpu_custom_call.1} parent=1 // pred_check
      _
    $region7: #{tpu_custom_call.1} parent=1 // pred_check_branch
      %11 = sbr.rel (0) target = $region9
    $region8: #{tpu_custom_call.1} parent=1 // pred_region
      _
    $region9: #{tpu_custom_call.1} parent=1 // pred_fallthru
      _
    %p12 = scmp.eq.s32.totalorder 0, 0
    // Predicated region
    $region10: #{tpu_custom_call.1} parent=1 // pred_check
      %p13 = pneg %p12
    $region11: #{tpu_custom_call.1} parent=1 // pred_check_branch
      %15 = sbr.rel (%p13) target = $region13
    $region12: #{tpu_custom_call.1} parent=1 // pred_region
      %vm16 = vcmask 523264
      %17 = vst.msk [vmem:[#allocation2] sm:$0xff] %vm16, 0.0
      %18 = vst.msk [vmem:[#allocation2 + $0x8] sm:$0xff] %vm16, 0.0
    $region13: #{tpu_custom_call.1} parent=1 // pred_fallthru
      _
    %v19 = vld [vmem:[#allocation2] sm:$0xff]
    %v20 = vld [vmem:[#allocation2 + $0x8] sm:$0xff]
    %v21 = vld [vmem:[%s0] sm:$0xff]
    %v22 = vld [vmem:[%s0 + $0x8] sm:$0xff]
    %v23 = vld [vmem:[%s1] sm:$0xff]
    %v24 = vld [vmem:[%s1 + $0x8] sm:$0xff]
    %v25 = vld [vmem:[%s1 + $0x10] sm:$0xff]
    %v26 = vld [vmem:[%s1 + $0x18] sm:$0xff]
    %v27 = vld [vmem:[%s1 + $0x20] sm:$0xff]
    %v28 = vld [vmem:[%s1 + $0x28] sm:$0xff]
    %v29 = vld [vmem:[%s1 + $0x30] sm:$0xff]
    %v30 = vld [vmem:[%s1 + $0x38] sm:$0xff]
    %vm31 = vcmask 261120
    %v33 = vsel %vm31, %v21, 0
    %v36 = vsel %vm31, %v22, 0
    %v39 = vsel %vm31, %v23, 0
    %v42 = vsel %vm31, %v24, 0
    %v45 = vsel %vm31, %v25, 0
    %v48 = vsel %vm31, %v26, 0
    %v51 = vsel %vm31, %v27, 0
    %v54 = vsel %vm31, %v28, 0
    %v57 = vsel %vm31, %v29, 0
    %v60 = vsel %vm31, %v30, 0
    %62 = vmatprep.subr.mxu0 0.0
    %63 = vmatpush1.xpose.msra.mxu0 0.0
    %64 = vmatprep.subr.mxu0 0.0
    %65 = vmatpush1.xpose.msra.mxu0 0.0
    %66 = vmatprep.subr.mxu0 0.0
    %67 = vmatpush1.xpose.msra.mxu0 0.0
    %68 = vmatprep.subr.mxu0 0.0
    %69 = vmatpush1.xpose.msra.mxu0 0.0
    %70 = vmatprep.subr.mxu0 0.0
    %71 = vmatpush1.xpose.msra.mxu0 0.0
    %72 = vmatprep.subr.mxu0 0.0
    %73 = vmatpush1.xpose.msra.mxu0 0.0
    %74 = vmatprep.subr.mxu0 0.0
    %75 = vmatpush1.xpose.msra.mxu0 0.0
    %76 = vmatprep.subr.mxu0 0.0
    %77 = vmatpush1.xpose.msra.mxu0 0.0
    %78 = vmatprep.subr.mxu0 0.0
    %79 = vmatpush1.xpose.msra.mxu0 %v60
    %80 = vmatprep.subr.mxu0 0.0
    %81 = vmatpush1.xpose.msra.mxu0 %v57
    %82 = vmatprep.subr.mxu0 0.0
    %83 = vmatpush1.xpose.msra.mxu0 %v54
    %84 = vmatprep.subr.mxu0 0.0
    %85 = vmatpush1.xpose.msra.mxu0 %v51
    %86 = vmatprep.subr.mxu0 0.0
    %87 = vmatpush1.xpose.msra.mxu0 %v48
    %88 = vmatprep.subr.mxu0 0.0
    %89 = vmatpush1.xpose.msra.mxu0 %v45
    %90 = vmatprep.subr.mxu0 0.0
    %91 = vmatpush1.xpose.msra.mxu0 %v42
    %92 = vmatprep.subr.mxu0 0.0
    %93 = vmatpush1.xpose.msra.mxu0 %v39
    %94 = vmatprep.subr.mxu0 0.0
    %95 = vmatpush2.xpose.msra.mxu0 0.0
    %96 = vmatprep.subr.mxu0 0.0
    %97 = vmatpush2.xpose.msra.mxu0 0.0
    %98 = vmatprep.subr.mxu0 0.0
    %99 = vmatpush2.xpose.msra.mxu0 0.0
    %100 = vmatprep.subr.mxu0 0.0
    %101 = vmatpush2.xpose.msra.mxu0 0.0
    %102 = vmatprep.subr.mxu0 0.0
    %103 = vmatpush2.xpose.msra.mxu0 0.0
    %104 = vmatprep.subr.mxu0 0.0
    %105 = vmatpush2.xpose.msra.mxu0 0.0
    %106 = vmatprep.subr.mxu0 0.0
    %107 = vmatpush2.xpose.msra.mxu0 0.0
    %108 = vmatprep.subr.mxu0 0.0
    %109 = vmatpush2.xpose.msra.mxu0 0.0
    %110 = vmatprep.subr.mxu0 0.0
    %111 = vmatpush2.xpose.msra.mxu0 0.0
    %112 = vmatprep.subr.mxu0 0.0
    %113 = vmatpush2.xpose.msra.mxu0 0.0
    %114 = vmatprep.subr.mxu0 0.0
    %115 = vmatpush2.xpose.msra.mxu0 0.0
    %116 = vmatprep.subr.mxu0 0.0
    %117 = vmatpush2.xpose.msra.mxu0 0.0
    %118 = vmatprep.subr.mxu0 0.0
    %119 = vmatpush2.xpose.msra.mxu0 0.0
    %120 = vmatprep.subr.mxu0 0.0
    %121 = vmatpush2.xpose.msra.mxu0 0.0
    %122 = vmatprep.subr.mxu0 0.0
    %123 = vmatpush2.xpose.msra.mxu0 0.0
    %124 = vmatprep.subr.mxu0 0.0
    %125 = vmatpush2.xpose.msra.mxu0 0.0
    %126 = vmatprep.mubr.f32.mxu0 0.0
    %127 = vmatmul.mubr.f32.gmra.mxu0 %v33
    %v128 = vpop.f32.mrf.mxu0
    %v129 = vadd.f32 0.0, %v128
    %v130 = vpop.f32.mrf.mxu0
    %131 = vmatprep.mubr.f32.mxu0 0.0
    %132 = vmatmul.mubr.f32.gmra.mxu0 %v36
    %v133 = vpop.f32.mrf.mxu0
    %v134 = vadd.f32 0.0, %v133
    %v135 = vpop.f32.mrf.mxu0
    %136 = vdwg.mxu0
    %v137 = vadd.f32 %v19, %v129
    %v138 = vadd.f32 %v20, %v134
    %vm139 = vcmask 523264
    %140 = vst.msk [vmem:[#allocation2] sm:$0xff] %vm139, %v137
    %141 = vst.msk [vmem:[#allocation2 + $0x8] sm:$0xff] %vm139, %v138
    // Predicated region
    $region14: #{tpu_custom_call.1} parent=1 // pred_check
      %p142 = pneg %p12
    $region15: #{tpu_custom_call.1} parent=1 // pred_check_branch
      %144 = sbr.rel (%p142) target = $region17
    $region16: #{tpu_custom_call.1} parent=1 // pred_region
      %v145 = vld [vmem:[#allocation2] sm:$0xff]
      %v146 = vld [vmem:[#allocation2 + $0x8] sm:$0xff]
      %147 = vst.msk [vmem:[#allocation3] sm:$0xff] %vm139, %v145
      %148 = vst.msk [vmem:[#allocation3 + $0x8] sm:$0xff] %vm139, %v146
    $region17: #{tpu_custom_call.1} parent=1 // pred_fallthru
      _
    // Predicated region
    $region18: #{tpu_custom_call.1} parent=1 // pred_check
      _
    $region19: #{tpu_custom_call.1} parent=1 // pred_check_branch
      %150 = sbr.rel (0) target = $region21
    $region20: #{tpu_custom_call.1} parent=1 // pred_region
      %s152 = ssub.s32 256, 256
      %153 = vsyncadd [#allocation4], %s152
      %s154 = sshll.u32 [#allocation3], 4
      %s155 = int_to_ptr.vmem [resolvable:$true] %s154
      %160 = dma.vmem_to_hbm [thread:$0]  %s155, 256, %s2, [#allocation4], 128, 128, 8
    $region21: #{tpu_custom_call.1} parent=1 // pred_fallthru
      _
    // Predicated region
    $region22: #{tpu_custom_call.1} parent=1 // pred_check
      _
    $region23: #{tpu_custom_call.1} parent=1 // pred_check_branch
      %162 = sbr.rel (0) target = $region25
    $region24: #{tpu_custom_call.1} parent=1 // pred_region
      %163 = dma.done [#allocation4], 256
    $region25: #{tpu_custom_call.1} parent=1 // pred_fallthru
      _
    %164 = vsyncpa [#allocation4], 1

</llo_original>
